<compile_context>
chip_gen: v7x
topology: tpu7x:2x2x1
jax: 0.10.0
libtpu: 0.0.40
codegen_flags: <defaults>
</compile_context>

<pallas_src>
import functools

import jax
import jax.numpy as jnp
from jax.experimental import pallas as pl
from jax.experimental.pallas import tpu as pltpu


PAD = 128      # lane-dense padding for every hidden/output feature dimension
MAX_TB = 512   # batch-tile cap (roofline sweet spot, bounded vreg pressure)


def _round_up(x, m):
    return ((x + m - 1) // m) * m


# ----------------------------------------------------------------------------
# Fused Pallas kernel: the entire MLP stack, activations never leave VMEM.
# ----------------------------------------------------------------------------
def _encoder_kernel(x_ref, w0_ref, b0_ref, w_ref, b_ref, o_ref, *, sigmoid_flags):
    # x_ref : (TB, d_in)        native-width input tile
    # w0_ref: (d_in, PAD)       first layer, pre-transposed + zero-padded
    # b0_ref: (1, PAD)
    # w_ref : (n-1, PAD, PAD)   remaining layers, stacked in execution order
    # b_ref : (n-1, 1, PAD)
    # o_ref : (TB, PAD)         lane-dense (unmasked) output store
    h = jnp.dot(x_ref[...], w0_ref[...],
                preferred_element_type=jnp.float32) + b0_ref[...]
    if sigmoid_flags[0]:
        h = jax.nn.sigmoid(h)
    for i, apply_sigmoid in enumerate(sigmoid_flags[1:]):   # static unroll
        h = jnp.dot(h, w_ref[i], preferred_element_type=jnp.float32) + b_ref[i]
        if apply_sigmoid:
            h = jax.nn.sigmoid(h)
    o_ref[...] = h.astype(o_ref.dtype)


@functools.partial(jax.jit, static_argnames=("sigmoid_flags", "d_out"))
def _encoder_fused(x, w0, b0, w_stack, b_stack, *, sigmoid_flags, d_out):
    x = x.astype(jnp.float32)
    B, d_in = x.shape
    nrest = w_stack.shape[0]

    # Batch tile: multiple of 8, capped at MAX_TB, and split so the grid has
    # >= 2 steps whenever B > 8 (v7x 2-TC sharding; near-free on v5e/v6e).
    # No batch padding: cdiv grid + Pallas-clipped ragged last block.
    TB = min(MAX_TB, max(8, _round_up(pl.cdiv(B, 2), 8)))
    grid = (pl.cdiv(B, TB),)

    out = pl.pallas_call(
        functools.partial(_encoder_kernel, sigmoid_flags=sigmoid_flags),
        out_shape=jax.ShapeDtypeStruct((B, PAD), jnp.float32),
        grid=grid,
        in_specs=[
            # Native-width input: last block dim == full array dim (legal),
            # no 4x lane over-read, no padded-slab HBM round trip.
            pl.BlockSpec((TB, d_in), lambda i: (i, 0)),
            # Grid-invariant weights/biases: constant index_map -> fetched once.
            pl.BlockSpec((d_in, PAD), lambda i: (0, 0)),
            pl.BlockSpec((1, PAD), lambda i: (0, 0)),
            pl.BlockSpec((nrest, PAD, PAD), lambda i: (0, 0, 0)),
            pl.BlockSpec((nrest, 1, PAD), lambda i: (0, 0, 0)),
        ],
        out_specs=pl.BlockSpec((TB, PAD), lambda i: (i, 0)),
        compiler_params=pltpu.CompilerParams(
            dimension_semantics=("parallel",)),
    )(x, w0, b0, w_stack, b_stack)

    # Tiny trailing slice back to the logical (B, d_out) width.
    return out[:, :d_out]


# ----------------------------------------------------------------------------
# Module structure / parameter construction (plain JAX glue)
# ----------------------------------------------------------------------------
def create_nn_structure(L):
    max_ind = len(L) - 1
    layers = []
    for i, v in enumerate(L):
        if i < max_ind:
            layers.append([v, L[i + 1]])
    encoder_layers = layers[:]
    for l in encoder_layers[::-1]:
        layers.append(l[::-1])
    return layers


def _applied_layer_sequence(L):
    """Static sequence of (layer_index, apply_sigmoid) exactly as the reference
    forward() would execute it (layer-skip quirk for len(L) > 3 included)."""
    n_total = len(create_nn_structure(L))
    num_layers = len(L)
    seq = [(i, True) for i in range(n_total) if i <= num_layers - 1]
    seq.append((n_total - 1, False))  # final linears[-1] with no activation
    return seq


def init_encoder_params(L, key):
    """Deterministic init mimicking nn.Linear default U(-1/sqrt(in), 1/sqrt(in))."""
    layer_dims = create_nn_structure(L)
    params = []
    for (d_in, d_out) in layer_dims:
        key, kw, kb = jax.random.split(key, 3)
        bound = 1.0 / jnp.sqrt(jnp.float32(d_in))
        w = jax.random.uniform(kw, (d_out, d_in), jnp.float32, -bound, bound)
        b = jax.random.uniform(kb, (d_out,), jnp.float32, -bound, bound)
        params.append((w, b))
    return params


def prepare_encoder(L, params):
    """Pack weights once: first applied layer kept at native input width
    (d_in, 128); remaining applied layers pre-transposed to (in, out),
    zero-padded to 128x128 and stacked in execution order."""
    seq = _applied_layer_sequence(L)
    flags = tuple(s for (_, s) in seq)
    n = len(seq)

    idx0, _ = seq[0]
    w_first, b_first = params[idx0]
    d_out0, d_in0 = w_first.shape
    w0 = jnp.zeros((d_in0, PAD), jnp.float32).at[:, :d_out0].set(w_first.T)
    b0 = jnp.zeros((1, PAD), jnp.float32).at[0, :d_out0].set(b_first)

    w_stack = jnp.zeros((n - 1, PAD, PAD), jnp.float32)
    b_stack = jnp.zeros((n - 1, 1, PAD), jnp.float32)
    for k, (idx, _) in enumerate(seq[1:]):
        w, b = params[idx]
        d_out_k, d_in_k = w.shape
        w_stack = w_stack.at[k, :d_in_k, :d_out_k].set(w.T)
        b_stack = b_stack.at[k, 0, :d_out_k].set(b)

    d_out_final = params[seq[-1][0]][0].shape[0]
    return (w0, b0, w_stack, b_stack, flags, d_out_final)


def encoder_forward(x, prepared):
    w0, b0, w_stack, b_stack, flags, d_out = prepared
    return _encoder_fused(x, w0, b0, w_stack, b_stack,
                          sigmoid_flags=flags, d_out=d_out)


# Pure-JAX reference for validation (uses the raw PyTorch-layout params).
def encoder_forward_ref(x, params, L):
    num_layers = len(L)
    for i, (w, b) in enumerate(params):
        if i <= num_layers - 1:
            x = jax.nn.sigmoid(x @ w.T + b)
    w_last, b_last = params[-1]
    return x @ w_last.T + b_last


if __name__ == "__main__":
    L = [32, 16, 8]          # autoencoder structure: 32 -> 16 -> 8 -> 16 -> 32

    key = jax.random.PRNGKey(0)
    key, kx1, kx2 = jax.random.split(key, 3)

    params = init_encoder_params(L, key)
    prepared = prepare_encoder(L, params)

    # Small batch (single grid step).
    x1 = jax.random.normal(kx1, (2, L[0]), jnp.float32)
    out1 = jax.block_until_ready(encoder_forward(x1, prepared))
    ref1 = encoder_forward_ref(x1, params, L)
    assert out1.shape == (2, L[0]), out1.shape
    assert jnp.allclose(out1, ref1, atol=1e-5, rtol=1e-5), \
        "Pallas output mismatch vs JAX reference (batch=2)"

    # Larger batch exercising the multi-step grid + ragged last block path.
    x2 = jax.random.normal(kx2, (20, L[0]), jnp.float32)
    out2 = jax.block_until_ready(encoder_forward(x2, prepared))
    ref2 = encoder_forward_ref(x2, params, L)
    assert out2.shape == (20, L[0]), out2.shape
    assert jnp.allclose(out2, ref2, atol=1e-5, rtol=1e-5), \
        "Pallas output mismatch vs JAX reference (batch=20)"

    print("KERNEL_OK")
</pallas_src>

<mosaic_0001>
module attributes {stable_mosaic.version = 11 : i64} {
  func.func @_encoder_kernel(%arg0: i32, %arg1: memref<8x32xf32, #tpu.memory_space<vmem>>, %arg2: memref<32x128xf32, #tpu.memory_space<vmem>>, %arg3: memref<1x128xf32, #tpu.memory_space<vmem>>, %arg4: memref<3x128x128xf32, #tpu.memory_space<vmem>>, %arg5: memref<3x1x128xf32, #tpu.memory_space<vmem>>, %arg6: memref<8x128xf32, #tpu.memory_space<vmem>>) attributes {dimension_semantics = [#tpu.dimension_semantics<parallel>], iteration_bounds = array<i64: 1>, scalar_prefetch = 0 : i64, scratch_operands = 0 : i64, tpu.core_type = #tpu.core_type<tc>, window_params = [{transform_indices = @transform_0, window_bounds = array<i64: 8, 32>}, {pipeline_mode = #tpu.pipeline_mode<synchronous>, transform_indices = @transform_1, window_bounds = array<i64: 32, 128>}, {pipeline_mode = #tpu.pipeline_mode<synchronous>, transform_indices = @transform_2, window_bounds = array<i64: 1, 128>}, {pipeline_mode = #tpu.pipeline_mode<synchronous>, transform_indices = @transform_3, window_bounds = array<i64: 3, 128, 128>}, {pipeline_mode = #tpu.pipeline_mode<synchronous>, transform_indices = @transform_4, window_bounds = array<i64: 3, 1, 128>}, {transform_indices = @transform_5, window_bounds = array<i64: 8, 128>}]} {
    %c0 = arith.constant 0 : index
    %c0_0 = arith.constant 0 : index
    %0 = vector.load %arg1[%c0, %c0_0] : memref<8x32xf32, #tpu.memory_space<vmem>>, vector<8x32xf32>
    %c0_1 = arith.constant 0 : index
    %c0_2 = arith.constant 0 : index
    %1 = vector.load %arg2[%c0_1, %c0_2] : memref<32x128xf32, #tpu.memory_space<vmem>>, vector<32x128xf32>
    %cst = arith.constant dense<0.000000e+00> : vector<8x128xf32>
    %2 = tpu.matmul %0, %1, %cst {dimension_numbers = #tpu.dot_dimension_numbers<[1], [0], [0], [1], [0, 0, 1, 1], [], []>} : vector<8x32xf32>, vector<32x128xf32>, vector<8x128xf32> -> vector<8x128xf32>
    %c0_3 = arith.constant 0 : index
    %c0_4 = arith.constant 0 : index
    %3 = vector.load %arg3[%c0_3, %c0_4] : memref<1x128xf32, #tpu.memory_space<vmem>>, vector<1x128xf32>
    %4 = vector.broadcast %3 : vector<1x128xf32> to vector<8x128xf32>
    %5 = arith.addf %2, %4 : vector<8x128xf32>
    %6 = arith.negf %5 : vector<8x128xf32>
    %7 = math.exp %6 : vector<8x128xf32>
    %cst_5 = arith.constant 1.000000e+00 : f32
    %8 = vector.broadcast %cst_5 : f32 to vector<8x128xf32>
    %9 = arith.addf %8, %7 : vector<8x128xf32>
    %10 = arith.divf %8, %9 : vector<8x128xf32>
    %c0_6 = arith.constant 0 : index
    %c0_7 = arith.constant 0 : index
    %c0_8 = arith.constant 0 : index
    %11 = vector.load %arg4[%c0_6, %c0_7, %c0_8] : memref<3x128x128xf32, #tpu.memory_space<vmem>>, vector<1x128x128xf32>
    %12 = vector.shape_cast %11 : vector<1x128x128xf32> to vector<128x128xf32>
    %cst_9 = arith.constant dense<0.000000e+00> : vector<8x128xf32>
    %13 = tpu.matmul %10, %12, %cst_9 {dimension_numbers = #tpu.dot_dimension_numbers<[1], [0], [0], [1], [0, 0, 1, 1], [], []>} : vector<8x128xf32>, vector<128x128xf32>, vector<8x128xf32> -> vector<8x128xf32>
    %c0_10 = arith.constant 0 : index
    %c0_11 = arith.constant 0 : index
    %c0_12 = arith.constant 0 : index
    %14 = vector.load %arg5[%c0_10, %c0_11, %c0_12] : memref<3x1x128xf32, #tpu.memory_space<vmem>>, vector<1x1x128xf32>
    %15 = vector.shape_cast %14 : vector<1x1x128xf32> to vector<1x128xf32>
    %16 = vector.broadcast %15 : vector<1x128xf32> to vector<8x128xf32>
    %17 = arith.addf %13, %16 : vector<8x128xf32>
    %18 = arith.negf %17 : vector<8x128xf32>
    %19 = math.exp %18 : vector<8x128xf32>
    %cst_13 = arith.constant 1.000000e+00 : f32
    %20 = vector.broadcast %cst_13 : f32 to vector<8x128xf32>
    %21 = arith.addf %20, %19 : vector<8x128xf32>
    %22 = arith.divf %20, %21 : vector<8x128xf32>
    %c1 = arith.constant 1 : index
    %c0_14 = arith.constant 0 : index
    %c0_15 = arith.constant 0 : index
    %23 = vector.load %arg4[%c1, %c0_14, %c0_15] : memref<3x128x128xf32, #tpu.memory_space<vmem>>, vector<1x128x128xf32>
    %24 = vector.shape_cast %23 : vector<1x128x128xf32> to vector<128x128xf32>
    %cst_16 = arith.constant dense<0.000000e+00> : vector<8x128xf32>
    %25 = tpu.matmul %22, %24, %cst_16 {dimension_numbers = #tpu.dot_dimension_numbers<[1], [0], [0], [1], [0, 0, 1, 1], [], []>} : vector<8x128xf32>, vector<128x128xf32>, vector<8x128xf32> -> vector<8x128xf32>
    %c1_17 = arith.constant 1 : index
    %c0_18 = arith.constant 0 : index
    %c0_19 = arith.constant 0 : index
    %26 = vector.load %arg5[%c1_17, %c0_18, %c0_19] : memref<3x1x128xf32, #tpu.memory_space<vmem>>, vector<1x1x128xf32>
    %27 = vector.shape_cast %26 : vector<1x1x128xf32> to vector<1x128xf32>
    %28 = vector.broadcast %27 : vector<1x128xf32> to vector<8x128xf32>
    %29 = arith.addf %25, %28 : vector<8x128xf32>
    %30 = arith.negf %29 : vector<8x128xf32>
    %31 = math.exp %30 : vector<8x128xf32>
    %cst_20 = arith.constant 1.000000e+00 : f32
    %32 = vector.broadcast %cst_20 : f32 to vector<8x128xf32>
    %33 = arith.addf %32, %31 : vector<8x128xf32>
    %34 = arith.divf %32, %33 : vector<8x128xf32>
    %c2 = arith.constant 2 : index
    %c0_21 = arith.constant 0 : index
    %c0_22 = arith.constant 0 : index
    %35 = vector.load %arg4[%c2, %c0_21, %c0_22] : memref<3x128x128xf32, #tpu.memory_space<vmem>>, vector<1x128x128xf32>
    %36 = vector.shape_cast %35 : vector<1x128x128xf32> to vector<128x128xf32>
    %cst_23 = arith.constant dense<0.000000e+00> : vector<8x128xf32>
    %37 = tpu.matmul %34, %36, %cst_23 {dimension_numbers = #tpu.dot_dimension_numbers<[1], [0], [0], [1], [0, 0, 1, 1], [], []>} : vector<8x128xf32>, vector<128x128xf32>, vector<8x128xf32> -> vector<8x128xf32>
    %c2_24 = arith.constant 2 : index
    %c0_25 = arith.constant 0 : index
    %c0_26 = arith.constant 0 : index
    %38 = vector.load %arg5[%c2_24, %c0_25, %c0_26] : memref<3x1x128xf32, #tpu.memory_space<vmem>>, vector<1x1x128xf32>
    %39 = vector.shape_cast %38 : vector<1x1x128xf32> to vector<1x128xf32>
    %40 = vector.broadcast %39 : vector<1x128xf32> to vector<8x128xf32>
    %41 = arith.addf %37, %40 : vector<8x128xf32>
    %c0_27 = arith.constant 0 : index
    %c0_28 = arith.constant 0 : index
    %42 = vector.load %arg6[%c0_27, %c0_28] : memref<8x128xf32, #tpu.memory_space<vmem>>, vector<8x128xf32>
    tpu.vector_store %arg6[%c0_27, %c0_28], %41 {strides = array<i32>} : memref<8x128xf32, #tpu.memory_space<vmem>>, vector<8x128xf32>,
    return
  }
  func.func @transform_0(%arg0: i32) -> (i32, i32) {
    %c0_i32 = arith.constant 0 : i32
    %c0_i32_0 = arith.constant 0 : i32
    return %arg0, %c0_i32 : i32, i32
  }
  func.func @transform_1(%arg0: i32) -> (i32, i32) {
    %c0_i32 = arith.constant 0 : i32
    %c0_i32_0 = arith.constant 0 : i32
    %c0_i32_1 = arith.constant 0 : i32
    return %c0_i32, %c0_i32_0 : i32, i32
  }
  func.func @transform_2(%arg0: i32) -> (i32, i32) {
    %c0_i32 = arith.constant 0 : i32
    %c0_i32_0 = arith.constant 0 : i32
    %c0_i32_1 = arith.constant 0 : i32
    return %c0_i32, %c0_i32_0 : i32, i32
  }
  func.func @transform_3(%arg0: i32) -> (i32, i32, i32) {
    %c0_i32 = arith.constant 0 : i32
    %c0_i32_0 = arith.constant 0 : i32
    %c0_i32_1 = arith.constant 0 : i32
    %c0_i32_2 = arith.constant 0 : i32
    return %c0_i32, %c0_i32_0, %c0_i32_1 : i32, i32, i32
  }
  func.func @transform_4(%arg0: i32) -> (i32, i32, i32) {
    %c0_i32 = arith.constant 0 : i32
    %c0_i32_0 = arith.constant 0 : i32
    %c0_i32_1 = arith.constant 0 : i32
    %c0_i32_2 = arith.constant 0 : i32
    return %c0_i32, %c0_i32_0, %c0_i32_1 : i32, i32, i32
  }
  func.func @transform_5(%arg0: i32) -> (i32, i32) {
    %c0_i32 = arith.constant 0 : i32
    %c0_i32_0 = arith.constant 0 : i32
    return %arg0, %c0_i32 : i32, i32
  }
}

</mosaic_0001>

<llo_original>
// kernel: _encoder_fused.1
$region0: #{_encoder_fused.1}
  #allocation0 [shape = 'u32[]', space=smem, size = 0x4, offset = 0x4, fixed_abs, tag = 'smem constant byte address 0x4 - core index']
  #allocation1 [shape = 'u32[144,128]{1,0:T(1,128)}', space=vmem, size = 0x12000, scoped, tag = 'internal scratch']
  %s0 = inlined_call_operand.hbm [shape: f32[2,32], index: 0, kind: input, shape index: {}]
  %s1 = inlined_call_operand.hbm [shape: f32[32,128], index: 1, kind: input, shape index: {}]
  %s2 = inlined_call_operand.vmem [shape: f32[1,128], index: 2, kind: input, shape index: {}]
  %s3 = inlined_call_operand.hbm [shape: f32[3,128,128], index: 3, kind: input, shape index: {}]
  %s4 = inlined_call_operand.vmem [shape: f32[3,1,128], index: 4, kind: input, shape index: {}]
  %s5 = inlined_call_operand.hbm [shape: f32[2,128], index: 5, kind: output, shape index: {}]
  %s6 = sld [smem:[#allocation0]]
  $region42: #{_encoder_fused.1} parent=0
    _
  %s8 = ssub.s32 1, %s6
  %s9 = scalar_select 0, %s8, %s6
  $region1: #{_encoder_fused.1} parent=0
    #allocation2 [shape = 'u8[4096]{0}', space=vmem, size = 0x1000, scoped, tag = 'input window, operand 0, single buffered']
    #allocation3 [shape = 's32[1]{0}', space=sflag, size = 0x4, scoped, tag = 'scoped memory for _encoder_fused.1']
    #allocation4 [shape = 's32[1]{0}', space=sflag, size = 0x4, scoped, tag = 'scoped memory for _encoder_fused.1']
    #allocation5 [shape = 'u8[16384]{0}', space=vmem, size = 0x4000, scoped, tag = 'input window, operand 1, single buffered']
    #allocation6 [shape = 's32[1]{0}', space=sflag, size = 0x4, scoped, tag = 'scoped memory for _encoder_fused.1']
    #allocation7 [shape = 'u8[196608]{0}', space=vmem, size = 0x30000, scoped, tag = 'input window, operand 3, single buffered']
    #allocation8 [shape = 'u8[4096]{0}', space=vmem, size = 0x1000, scoped, tag = 'output window, operand 0, single buffered']
    %10 = vsyncpa [#allocation3], 0
    %11 = vsyncpa [#allocation6], 0
    %12 = vsyncpa [#allocation4], 0
    // Predicated region
    $region2: #{_encoder_fused.1} parent=1 // pred_check
      _
    $region3: #{_encoder_fused.1} parent=1 // pred_check_branch
      %14 = sbr.rel (0) target = $region5
    $region4: #{_encoder_fused.1} parent=1 // pred_region
      %s16 = ssub.s32 128, 32
      %17 = vsyncadd [#allocation3], %s16
      %s18 = sshll.u32 [#allocation2], 4
      %s19 = int_to_ptr.vmem [resolvable:$true] %s18
      %24 = dma.hbm_to_vmem [thread:$0]  %s0, 32, %s19, [#allocation3], 32, 32, 2
    $region5: #{_encoder_fused.1} parent=1 // pred_fallthru
      _
    // Predicated region
    $region6: #{_encoder_fused.1} parent=1 // pred_check
      _
    $region7: #{_encoder_fused.1} parent=1 // pred_check_branch
      %26 = sbr.rel (0) target = $region9
    $region8: #{_encoder_fused.1} parent=1 // pred_region
      %s28 = ssub.s32 512, 512
      %29 = vsyncadd [#allocation6], %s28
      %s30 = sshll.u32 [#allocation5], 4
      %s31 = int_to_ptr.vmem [resolvable:$true] %s30
      %36 = dma.hbm_to_vmem [thread:$0]  %s1, 512, %s31, [#allocation6], 128, 128, 8
    $region9: #{_encoder_fused.1} parent=1 // pred_fallthru
      _
    // Predicated region
    $region10: #{_encoder_fused.1} parent=1 // pred_check
      _
    $region11: #{_encoder_fused.1} parent=1 // pred_check_branch
      %38 = sbr.rel (0) target = $region13
    $region12: #{_encoder_fused.1} parent=1 // pred_region
      _
    $region13: #{_encoder_fused.1} parent=1 // pred_fallthru
      _
    // Predicated region
    $region14: #{_encoder_fused.1} parent=1 // pred_check
      _
    $region15: #{_encoder_fused.1} parent=1 // pred_check_branch
      %40 = sbr.rel (0) target = $region17
    $region16: #{_encoder_fused.1} parent=1 // pred_region
      %s42 = ssub.s32 6144, 6144
      %43 = vsyncadd [#allocation6], %s42
      %s44 = sshll.u32 [#allocation7], 4
      %s45 = int_to_ptr.vmem [resolvable:$true] %s44
      %50 = dma.hbm_to_vmem [thread:$0]  %s3, 6144, %s45, [#allocation6], 128, 128, 8
    $region17: #{_encoder_fused.1} parent=1 // pred_fallthru
      _
    // Predicated region
    $region18: #{_encoder_fused.1} parent=1 // pred_check
      _
    $region19: #{_encoder_fused.1} parent=1 // pred_check_branch
      %52 = sbr.rel (0) target = $region21
    $region20: #{_encoder_fused.1} parent=1 // pred_region
      _
    $region21: #{_encoder_fused.1} parent=1 // pred_fallthru
      _
    // Predicated region
    $region22: #{_encoder_fused.1} parent=1 // pred_check
      _
    $region23: #{_encoder_fused.1} parent=1 // pred_check_branch
      %54 = sbr.rel (0) target = $region25
    $region24: #{_encoder_fused.1} parent=1 // pred_region
      %55 = dma.done [#allocation3], 128
    $region25: #{_encoder_fused.1} parent=1 // pred_fallthru
      _
    // Predicated region
    $region26: #{_encoder_fused.1} parent=1 // pred_check
      _
    $region27: #{_encoder_fused.1} parent=1 // pred_check_branch
      %57 = sbr.rel (0) target = $region29
    $region28: #{_encoder_fused.1} parent=1 // pred_region
      %58 = dma.done [#allocation6], 512
    $region29: #{_encoder_fused.1} parent=1 // pred_fallthru
      _
    // Predicated region
    $region30: #{_encoder_fused.1} parent=1 // pred_check
      _
    $region31: #{_encoder_fused.1} parent=1 // pred_check_branch
      %60 = sbr.rel (0) target = $region33
    $region32: #{_encoder_fused.1} parent=1 // pred_region
      %61 = dma.done [#allocation6], 6144
    $region33: #{_encoder_fused.1} parent=1 // pred_fallthru
      _
    %v62 = vld [vmem:[#allocation2] sm:$0xff]
    %v63 = vld [vmem:[#allocation5] sm:$0xff]
    %v64 = vld [vmem:[#allocation5 + $0x8] sm:$0xff]
    %v65 = vld [vmem:[#allocation5 + $0x10] sm:$0xff]
    %v66 = vld [vmem:[#allocation5 + $0x18] sm:$0xff]
    %v67 = vld [vmem:[%s2] sm:$0x1]
    %v69 = vlaneseq
    %v70 = vshrl.u32 %v69, 7
    %v71 = vsub.s32 0, %v70
    %v72 = vrot.slane %v67, %v71
    %vm74 = vcmask 261120
    %v76 = vsel %vm74, %v62, 0
    %78 = vmatprep.subr.mxu0 0.0
    %79 = vmatpush1.msra.mxu0 %v63
    %80 = vmatprep.subr.mxu0 0.0
    %81 = vmatpush1.msra.mxu0 %v64
    %82 = vmatprep.subr.mxu0 0.0
    %83 = vmatpush1.msra.mxu0 %v65
    %84 = vmatprep.subr.mxu0 0.0
    %85 = vmatpush1.msra.mxu0 %v66
    %86 = vmatprep.subr.mxu0 0.0
    %87 = vmatpush1.msra.mxu0 0.0
    %88 = vmatprep.subr.mxu0 0.0
    %89 = vmatpush1.msra.mxu0 0.0
    %90 = vmatprep.subr.mxu0 0.0
    %91 = vmatpush1.msra.mxu0 0.0
    %92 = vmatprep.subr.mxu0 0.0
    %93 = vmatpush1.msra.mxu0 0.0
    %94 = vmatprep.subr.mxu0 0.0
    %95 = vmatpush1.msra.mxu0 0.0
    %96 = vmatprep.subr.mxu0 0.0
    %97 = vmatpush1.msra.mxu0 0.0
    %98 = vmatprep.subr.mxu0 0.0
    %99 = vmatpush1.msra.mxu0 0.0
    %100 = vmatprep.subr.mxu0 0.0
    %101 = vmatpush1.msra.mxu0 0.0
    %102 = vmatprep.subr.mxu0 0.0
    %103 = vmatpush1.msra.mxu0 0.0
    %104 = vmatprep.subr.mxu0 0.0
    %105 = vmatpush1.msra.mxu0 0.0
    %106 = vmatprep.subr.mxu0 0.0
    %107 = vmatpush1.msra.mxu0 0.0
    %108 = vmatprep.subr.mxu0 0.0
    %109 = vmatpush1.msra.mxu0 0.0
    %110 = vmatprep.subr.mxu0 0.0
    %111 = vmatpush1.msra.mxu0 0.0
    %112 = vmatprep.subr.mxu0 0.0
    %113 = vmatpush1.msra.mxu0 0.0
    %114 = vmatprep.subr.mxu0 0.0
    %115 = vmatpush1.msra.mxu0 0.0
    %116 = vmatprep.subr.mxu0 0.0
    %117 = vmatpush1.msra.mxu0 0.0
    %118 = vmatprep.subr.mxu0 0.0
    %119 = vmatpush1.msra.mxu0 0.0
    %120 = vmatprep.subr.mxu0 0.0
    %121 = vmatpush1.msra.mxu0 0.0
    %122 = vmatprep.subr.mxu0 0.0
    %123 = vmatpush1.msra.mxu0 0.0
    %124 = vmatprep.subr.mxu0 0.0
    %125 = vmatpush1.msra.mxu0 0.0
    %126 = vmatprep.subr.mxu0 0.0
    %127 = vmatpush1.msra.mxu0 0.0
    %128 = vmatprep.subr.mxu0 0.0
    %129 = vmatpush1.msra.mxu0 0.0
    %130 = vmatprep.subr.mxu0 0.0
    %131 = vmatpush1.msra.mxu0 0.0
    %132 = vmatprep.subr.mxu0 0.0
    %133 = vmatpush1.msra.mxu0 0.0
    %134 = vmatprep.subr.mxu0 0.0
    %135 = vmatpush1.msra.mxu0 0.0
    %136 = vmatprep.subr.mxu0 0.0
    %137 = vmatpush1.msra.mxu0 0.0
    %138 = vmatprep.subr.mxu0 0.0
    %139 = vmatpush1.msra.mxu0 0.0
    %140 = vmatprep.subr.mxu0 0.0
    %141 = vmatpush1.msra.mxu0 0.0
    %142 = vmatprep.mubr.f32.mxu0 0.0
    %143 = vmatmul.mubr.f32.gmra.mrb[0].mxu0 %v76
    %v144 = vpop.f32.mrb[0].mxu0
    %v145 = vadd.f32 %v72, %v144
    %v146 = vpop.f32.mrb[0].mxu0
    %147 = vdwg.mxu0
    %v148 = vxor.u32 %v145, 2147483648
    %v149 = vmul.f32 %v148, 1.442695
    %v150 = vpow.pop %v149
    %v151 = vadd.f32 %v150, 1.0
    %v152 = vrcp.pop %v151
    %v153 = vmul.f32 1.0, %v152
    %v154 = vld [vmem:[#allocation7] sm:$0xff]
    %v155 = vld [vmem:[#allocation7 + $0x8] sm:$0xff]
    %v156 = vld [vmem:[#allocation7 + $0x10] sm:$0xff]
    %v157 = vld [vmem:[#allocation7 + $0x18] sm:$0xff]
    %v158 = vld [vmem:[#allocation7 + $0x20] sm:$0xff]
    %v159 = vld [vmem:[#allocation7 + $0x28] sm:$0xff]
    %v160 = vld [vmem:[#allocation7 + $0x30] sm:$0xff]
    %v161 = vld [vmem:[#allocation7 + $0x38] sm:$0xff]
    %v162 = vld [vmem:[#allocation7 + $0x40] sm:$0xff]
    %v163 = vld [vmem:[#allocation7 + $0x48] sm:$0xff]
    %v164 = vld [vmem:[#allocation7 + $0x50] sm:$0xff]
    %v165 = vld [vmem:[#allocation7 + $0x58] sm:$0xff]
    %v166 = vld [vmem:[#allocation7 + $0x60] sm:$0xff]
    %v167 = vld [vmem:[#allocation7 + $0x68] sm:$0xff]
    %v168 = vld [vmem:[#allocation7 + $0x70] sm:$0xff]
    %v169 = vld [vmem:[#allocation7 + $0x78] sm:$0xff]
    %v170 = vld [vmem:[%s4] sm:$0x1]
    %v172 = vlaneseq
    %v173 = vshrl.u32 %v172, 7
    %v174 = vsub.s32 0, %v173
    %v175 = vrot.slane %v170, %v174
    %177 = vmatprep.subr.mxu0 0.0
    %178 = vmatpush1.msra.mxu0 %v154
    %179 = vmatprep.subr.mxu0 0.0
    %180 = vmatpush1.msra.mxu0 %v155
    %181 = vmatprep.subr.mxu0 0.0
    %182 = vmatpush1.msra.mxu0 %v156
    %183 = vmatprep.subr.mxu0 0.0
    %184 = vmatpush1.msra.mxu0 %v157
    %185 = vmatprep.subr.mxu0 0.0
    %186 = vmatpush1.msra.mxu0 %v158
    %187 = vmatprep.subr.mxu0 0.0
    %188 = vmatpush1.msra.mxu0 %v159
    %189 = vmatprep.subr.mxu0 0.0
    %190 = vmatpush1.msra.mxu0 %v160
    %191 = vmatprep.subr.mxu0 0.0
    %192 = vmatpush1.msra.mxu0 %v161
    %193 = vmatprep.subr.mxu0 0.0
    %194 = vmatpush1.msra.mxu0 %v162
    %195 = vmatprep.subr.mxu0 0.0
    %196 = vmatpush1.msra.mxu0 %v163
    %197 = vmatprep.subr.mxu0 0.0
    %198 = vmatpush1.msra.mxu0 %v164
    %199 = vmatprep.subr.mxu0 0.0
    %200 = vmatpush1.msra.mxu0 %v165
    %201 = vmatprep.subr.mxu0 0.0
    %202 = vmatpush1.msra.mxu0 %v166
    %203 = vmatprep.subr.mxu0 0.0
    %204 = vmatpush1.msra.mxu0 %v167
    %205 = vmatprep.subr.mxu0 0.0
    %206 = vmatpush1.msra.mxu0 %v168
    %207 = vmatprep.subr.mxu0 0.0
    %208 = vmatpush1.msra.mxu0 %v169
    %209 = vmatprep.subr.mxu0 0.0
    %210 = vmatpush1.msra.mxu0 0.0
    %211 = vmatprep.subr.mxu0 0.0
    %212 = vmatpush1.msra.mxu0 0.0
    %213 = vmatprep.subr.mxu0 0.0
    %214 = vmatpush1.msra.mxu0 0.0
    %215 = vmatprep.subr.mxu0 0.0
    %216 = vmatpush1.msra.mxu0 0.0
    %217 = vmatprep.subr.mxu0 0.0
    %218 = vmatpush1.msra.mxu0 0.0
    %219 = vmatprep.subr.mxu0 0.0
    %220 = vmatpush1.msra.mxu0 0.0
    %221 = vmatprep.subr.mxu0 0.0
    %222 = vmatpush1.msra.mxu0 0.0
    %223 = vmatprep.subr.mxu0 0.0
    %224 = vmatpush1.msra.mxu0 0.0
    %225 = vmatprep.subr.mxu0 0.0
    %226 = vmatpush1.msra.mxu0 0.0
    %227 = vmatprep.subr.mxu0 0.0
    %228 = vmatpush1.msra.mxu0 0.0
    %229 = vmatprep.subr.mxu0 0.0
    %230 = vmatpush1.msra.mxu0 0.0
    %231 = vmatprep.subr.mxu0 0.0
    %232 = vmatpush1.msra.mxu0 0.0
    %233 = vmatprep.subr.mxu0 0.0
    %234 = vmatpush1.msra.mxu0 0.0
    %235 = vmatprep.subr.mxu0 0.0
    %236 = vmatpush1.msra.mxu0 0.0
    %237 = vmatprep.subr.mxu0 0.0
    %238 = vmatpush1.msra.mxu0 0.0
    %239 = vmatprep.subr.mxu0 0.0
    %240 = vmatpush1.msra.mxu0 0.0
    %241 = vmatprep.mubr.f32.mxu0 0.0
    %242 = vmatmul.mubr.f32.gmra.mrb[0].mxu0 %v153
    %v243 = vpop.f32.mrb[0].mxu0
    %v244 = vadd.f32 %v175, %v243
    %v245 = vpop.f32.mrb[0].mxu0
    %246 = vdwg.mxu0
    %v247 = vxor.u32 %v244, 2147483648
    %v248 = vmul.f32 %v247, 1.442695
    %v249 = vpow.pop %v248
    %v250 = vadd.f32 %v249, 1.0
    %v251 = vrcp.pop %v250
    %v252 = vmul.f32 1.0, %v251
    %s253 = scalar_lea.vmem [#allocation7], 128
    %v254 = vld [vmem:[%s253] sm:$0xff]
    %v255 = vld [vmem:[%s253 + $0x8] sm:$0xff]
    %v256 = vld [vmem:[%s253 + $0x10] sm:$0xff]
    %v257 = vld [vmem:[%s253 + $0x18] sm:$0xff]
    %v258 = vld [vmem:[%s253 + $0x20] sm:$0xff]
    %v259 = vld [vmem:[%s253 + $0x28] sm:$0xff]
    %v260 = vld [vmem:[%s253 + $0x30] sm:$0xff]
    %v261 = vld [vmem:[%s253 + $0x38] sm:$0xff]
    %v262 = vld [vmem:[%s253 + $0x40] sm:$0xff]
    %v263 = vld [vmem:[%s253 + $0x48] sm:$0xff]
    %v264 = vld [vmem:[%s253 + $0x50] sm:$0xff]
    %v265 = vld [vmem:[%s253 + $0x58] sm:$0xff]
    %v266 = vld [vmem:[%s253 + $0x60] sm:$0xff]
    %v267 = vld [vmem:[%s253 + $0x68] sm:$0xff]
    %v268 = vld [vmem:[%s253 + $0x70] sm:$0xff]
    %v269 = vld [vmem:[%s253 + $0x78] sm:$0xff]
    %s270 = scalar_lea.vmem %s4, 1
    %v271 = vld [vmem:[%s270] sm:$0x1]
    %v273 = vlaneseq
    %v274 = vshrl.u32 %v273, 7
    %v275 = vsub.s32 0, %v274
    %v276 = vrot.slane %v271, %v275
    %278 = vmatprep.subr.mxu0 0.0
    %279 = vmatpush1.msra.mxu0 %v254
    %280 = vmatprep.subr.mxu0 0.0
    %281 = vmatpush1.msra.mxu0 %v255
    %282 = vmatprep.subr.mxu0 0.0
    %283 = vmatpush1.msra.mxu0 %v256
    %284 = vmatprep.subr.mxu0 0.0
    %285 = vmatpush1.msra.mxu0 %v257
    %286 = vmatprep.subr.mxu0 0.0
    %287 = vmatpush1.msra.mxu0 %v258
    %288 = vmatprep.subr.mxu0 0.0
    %289 = vmatpush1.msra.mxu0 %v259
    %290 = vmatprep.subr.mxu0 0.0
    %291 = vmatpush1.msra.mxu0 %v260
    %292 = vmatprep.subr.mxu0 0.0
    %293 = vmatpush1.msra.mxu0 %v261
    %294 = vmatprep.subr.mxu0 0.0
    %295 = vmatpush1.msra.mxu0 %v262
    %296 = vmatprep.subr.mxu0 0.0
    %297 = vmatpush1.msra.mxu0 %v263
    %298 = vmatprep.subr.mxu0 0.0
    %299 = vmatpush1.msra.mxu0 %v264
    %300 = vmatprep.subr.mxu0 0.0
    %301 = vmatpush1.msra.mxu0 %v265
    %302 = vmatprep.subr.mxu0 0.0
    %303 = vmatpush1.msra.mxu0 %v266
    %304 = vmatprep.subr.mxu0 0.0
    %305 = vmatpush1.msra.mxu0 %v267
    %306 = vmatprep.subr.mxu0 0.0
    %307 = vmatpush1.msra.mxu0 %v268
    %308 = vmatprep.subr.mxu0 0.0
    %309 = vmatpush1.msra.mxu0 %v269
    %310 = vmatprep.subr.mxu0 0.0
    %311 = vmatpush1.msra.mxu0 0.0
    %312 = vmatprep.subr.mxu0 0.0
    %313 = vmatpush1.msra.mxu0 0.0
    %314 = vmatprep.subr.mxu0 0.0
    %315 = vmatpush1.msra.mxu0 0.0
    %316 = vmatprep.subr.mxu0 0.0
    %317 = vmatpush1.msra.mxu0 0.0
    %318 = vmatprep.subr.mxu0 0.0
    %319 = vmatpush1.msra.mxu0 0.0
    %320 = vmatprep.subr.mxu0 0.0
    %321 = vmatpush1.msra.mxu0 0.0
    %322 = vmatprep.subr.mxu0 0.0
    %323 = vmatpush1.msra.mxu0 0.0
    %324 = vmatprep.subr.mxu0 0.0
    %325 = vmatpush1.msra.mxu0 0.0
    %326 = vmatprep.subr.mxu0 0.0
    %327 = vmatpush1.msra.mxu0 0.0
    %328 = vmatprep.subr.mxu0 0.0
    %329 = vmatpush1.msra.mxu0 0.0
    %330 = vmatprep.subr.mxu0 0.0
    %331 = vmatpush1.msra.mxu0 0.0
    %332 = vmatprep.subr.mxu0 0.0
    %333 = vmatpush1.msra.mxu0 0.0
    %334 = vmatprep.subr.mxu0 0.0
    %335 = vmatpush1.msra.mxu0 0.0
    %336 = vmatprep.subr.mxu0 0.0
    %337 = vmatpush1.msra.mxu0 0.0
    %338 = vmatprep.subr.mxu0 0.0
    %339 = vmatpush1.msra.mxu0 0.0
    %340 = vmatprep.subr.mxu0 0.0
    %341 = vmatpush1.msra.mxu0 0.0
    %342 = vmatprep.mubr.f32.mxu0 0.0
    %343 = vmatmul.mubr.f32.gmra.mrb[0].mxu0 %v252
    %v344 = vpop.f32.mrb[0].mxu0
    %v345 = vadd.f32 %v276, %v344
    %v346 = vpop.f32.mrb[0].mxu0
    %347 = vdwg.mxu0
    %v348 = vxor.u32 %v345, 2147483648
    %v349 = vmul.f32 %v348, 1.442695
    %v350 = vpow.pop %v349
    %v351 = vadd.f32 %v350, 1.0
    %v352 = vrcp.pop %v351
    %v353 = vmul.f32 1.0, %v352
    %s354 = scalar_lea.vmem [#allocation7], 256
    %v355 = vld [vmem:[%s354] sm:$0xff]
    %v356 = vld [vmem:[%s354 + $0x8] sm:$0xff]
    %v357 = vld [vmem:[%s354 + $0x10] sm:$0xff]
    %v358 = vld [vmem:[%s354 + $0x18] sm:$0xff]
    %v359 = vld [vmem:[%s354 + $0x20] sm:$0xff]
    %v360 = vld [vmem:[%s354 + $0x28] sm:$0xff]
    %v361 = vld [vmem:[%s354 + $0x30] sm:$0xff]
    %v362 = vld [vmem:[%s354 + $0x38] sm:$0xff]
    %v363 = vld [vmem:[%s354 + $0x40] sm:$0xff]
    %v364 = vld [vmem:[%s354 + $0x48] sm:$0xff]
    %v365 = vld [vmem:[%s354 + $0x50] sm:$0xff]
    %v366 = vld [vmem:[%s354 + $0x58] sm:$0xff]
    %v367 = vld [vmem:[%s354 + $0x60] sm:$0xff]
    %v368 = vld [vmem:[%s354 + $0x68] sm:$0xff]
    %v369 = vld [vmem:[%s354 + $0x70] sm:$0xff]
    %v370 = vld [vmem:[%s354 + $0x78] sm:$0xff]
    %s371 = scalar_lea.vmem %s4, 2
    %v372 = vld [vmem:[%s371] sm:$0x1]
    %v374 = vlaneseq
    %v375 = vshrl.u32 %v374, 7
    %v376 = vsub.s32 0, %v375
    %v377 = vrot.slane %v372, %v376
    %379 = vmatprep.subr.mxu0 0.0
    %380 = vmatpush1.msra.mxu0 %v355
    %381 = vmatprep.subr.mxu0 0.0
    %382 = vmatpush1.msra.mxu0 %v356
    %383 = vmatprep.subr.mxu0 0.0
    %384 = vmatpush1.msra.mxu0 %v357
    %385 = vmatprep.subr.mxu0 0.0
    %386 = vmatpush1.msra.mxu0 %v358
    %387 = vmatprep.subr.mxu0 0.0
    %388 = vmatpush1.msra.mxu0 %v359
    %389 = vmatprep.subr.mxu0 0.0
    %390 = vmatpush1.msra.mxu0 %v360
    %391 = vmatprep.subr.mxu0 0.0
    %392 = vmatpush1.msra.mxu0 %v361
    %393 = vmatprep.subr.mxu0 0.0
    %394 = vmatpush1.msra.mxu0 %v362
    %395 = vmatprep.subr.mxu0 0.0
    %396 = vmatpush1.msra.mxu0 %v363
    %397 = vmatprep.subr.mxu0 0.0
    %398 = vmatpush1.msra.mxu0 %v364
    %399 = vmatprep.subr.mxu0 0.0
    %400 = vmatpush1.msra.mxu0 %v365
    %401 = vmatprep.subr.mxu0 0.0
    %402 = vmatpush1.msra.mxu0 %v366
    %403 = vmatprep.subr.mxu0 0.0
    %404 = vmatpush1.msra.mxu0 %v367
    %405 = vmatprep.subr.mxu0 0.0
    %406 = vmatpush1.msra.mxu0 %v368
    %407 = vmatprep.subr.mxu0 0.0
    %408 = vmatpush1.msra.mxu0 %v369
    %409 = vmatprep.subr.mxu0 0.0
    %410 = vmatpush1.msra.mxu0 %v370
    %411 = vmatprep.subr.mxu0 0.0
    %412 = vmatpush1.msra.mxu0 0.0
    %413 = vmatprep.subr.mxu0 0.0
    %414 = vmatpush1.msra.mxu0 0.0
    %415 = vmatprep.subr.mxu0 0.0
    %416 = vmatpush1.msra.mxu0 0.0
    %417 = vmatprep.subr.mxu0 0.0
    %418 = vmatpush1.msra.mxu0 0.0
    %419 = vmatprep.subr.mxu0 0.0
    %420 = vmatpush1.msra.mxu0 0.0
    %421 = vmatprep.subr.mxu0 0.0
    %422 = vmatpush1.msra.mxu0 0.0
    %423 = vmatprep.subr.mxu0 0.0
    %424 = vmatpush1.msra.mxu0 0.0
    %425 = vmatprep.subr.mxu0 0.0
    %426 = vmatpush1.msra.mxu0 0.0
    %427 = vmatprep.subr.mxu0 0.0
    %428 = vmatpush1.msra.mxu0 0.0
    %429 = vmatprep.subr.mxu0 0.0
    %430 = vmatpush1.msra.mxu0 0.0
    %431 = vmatprep.subr.mxu0 0.0
    %432 = vmatpush1.msra.mxu0 0.0
    %433 = vmatprep.subr.mxu0 0.0
    %434 = vmatpush1.msra.mxu0 0.0
    %435 = vmatprep.subr.mxu0 0.0
    %436 = vmatpush1.msra.mxu0 0.0
    %437 = vmatprep.subr.mxu0 0.0
    %438 = vmatpush1.msra.mxu0 0.0
    %439 = vmatprep.subr.mxu0 0.0
    %440 = vmatpush1.msra.mxu0 0.0
    %441 = vmatprep.subr.mxu0 0.0
    %442 = vmatpush1.msra.mxu0 0.0
    %443 = vmatprep.mubr.f32.mxu0 0.0
    %444 = vmatmul.mubr.f32.gmra.mrb[0].mxu0 %v353
    %v445 = vpop.f32.mrb[0].mxu0
    %v446 = vadd.f32 %v377, %v445
    %v447 = vpop.f32.mrb[0].mxu0
    %448 = vdwg.mxu0
    %449 = vst [vmem:[#allocation8] sm:$0xff] %v446
    // Predicated region
    $region34: #{_encoder_fused.1} parent=1 // pred_check
      _
    $region35: #{_encoder_fused.1} parent=1 // pred_check_branch
      %451 = sbr.rel (0) target = $region37
    $region36: #{_encoder_fused.1} parent=1 // pred_region
      %s453 = ssub.s32 128, 32
      %454 = vsyncadd [#allocation4], %s453
      %s455 = sshll.u32 [#allocation8], 4
      %s456 = int_to_ptr.vmem [resolvable:$true] %s455
      %461 = dma.vmem_to_hbm [thread:$0]  %s456, 32, %s5, [#allocation4], 32, 32, 2
    $region37: #{_encoder_fused.1} parent=1 // pred_fallthru
      _
    // Predicated region
    $region38: #{_encoder_fused.1} parent=1 // pred_check
      _
    $region39: #{_encoder_fused.1} parent=1 // pred_check_branch
      %463 = sbr.rel (0) target = $region41
    $region40: #{_encoder_fused.1} parent=1 // pred_region
      %464 = dma.done [#allocation4], 128
    $region41: #{_encoder_fused.1} parent=1 // pred_fallthru
      _
    %465 = vsyncpa [#allocation3], 1
    %466 = vsyncpa [#allocation6], 1
    %467 = vsyncpa [#allocation4], 1

</llo_original>
